<compile_context>
chip_gen: v5e
topology: v5e:2x2
jax: 0.10.0
libtpu: 0.0.40
codegen_flags: <defaults>
</compile_context>

<pallas_src>
import math

import jax
import jax.numpy as jnp
from jax import lax
from jax.experimental import pallas as pl
from jax.experimental.pallas import tpu as pltpu

_INV_SQRT2 = 0.7071067811865476


def _gelu_exact(x):
    # x * 0.5 * (1 + erf(x / sqrt(2))) -- constant multiply, no divide.
    return x * 0.5 * (1.0 + lax.erf(x * _INV_SQRT2))


def _dense_gelu_kernel(x_ref, w_ref, b_ref, o_ref):
    # x_ref: (tm, K)  w_ref: (K, tn)  b_ref: (1, tn) f32  o_ref: (tm, tn)
    y = jnp.dot(x_ref[...], w_ref[...], preferred_element_type=jnp.float32)
    y = y + b_ref[...].astype(jnp.float32)
    o_ref[...] = _gelu_exact(y).astype(o_ref.dtype)


def _round_up(x, m):
    return (x + m - 1) // m * m


def _vmem_budget():
    """~75% of physical VMEM: ≈48 MiB on v7x (64 MiB/TC), ≈96 MiB on v5e/v6e."""
    try:
        cap = int(pltpu.get_tpu_info().vmem_capacity_bytes)
    except Exception:
        cap = 64 * 2**20
    return max(32 * 2**20, (cap * 3) // 4)


def _pick_tiles(M, K, Np, in_dtype, out_dtype, budget):
    isz = jnp.dtype(in_dtype).itemsize
    osz = jnp.dtype(out_dtype).itemsize
    # dtype-aware sublane rounding: bf16 packs 2 rows / sublane, int8 packs 4.
    sub = 32 if isz == 1 else (16 if isz == 2 else 8)

    def vmem_need(tm, tn):
        return (2 * tm * K * isz        # double-buffered activation tile
                + 2 * K * tn * isz      # double-buffered weight slab
                + 2 * tn * 4            # bias (f32)
                + 2 * tm * tn * osz     # double-buffered output tile
                + 2 * tm * tn * 4)      # f32 matmul acc + erf temporaries

    tm_target = min(_round_up(M, sub), 1024)
    tm_floor = min(tm_target, _round_up(256, sub))

    # Prefer the full (padded) N as the lane tile: activations / weights /
    # outputs then stream through HBM exactly once. Fall back to divisors.
    tn_cands = [Np] + [t for t in (2048, 1536, 1024, 512, 256, 128)
                       if t < Np and Np % t == 0]
    tn = next((t for t in tn_cands if vmem_need(tm_floor, t) <= budget),
              tn_cands[-1])

    tm = tm_target
    while tm > tm_floor and vmem_need(tm, tn) > budget:
        tm = max(tm_floor, _round_up(tm // 2, sub))

    # Avoid the whole-tensor jnp.pad of x: prefer a tm that divides M exactly
    # (only shrink a little -- per-step overhead grows as tm drops).
    if M % tm != 0:
        for cand in range(tm - sub, max(sub, tm // 4) - 1, -sub):
            if cand > 0 and M % cand == 0 and vmem_need(cand, tn) <= budget:
                tm = cand
                break
    return tm, tn


def dense_gelu_pair(x, w, b, *, n_valid=None, out_dtype=None):
    """gelu(x @ w + b) for a stacked pair of independent linear layers.

    x: (P, M, K)   activations (P independent problems, here P=2)
    w: (P, K, Np)  pre-padded weights (transposed from PyTorch's (N, K))
    b: (P, 1, Np)  pre-padded biases, kept in f32 (added in the f32 epilogue)
    Returns (P, M, n_valid); MXU accumulation is f32.
    """
    P, M, K = x.shape
    _, _, Np = w.shape
    if n_valid is None:
        n_valid = Np
    if out_dtype is None:
        out_dtype = x.dtype

    budget = _vmem_budget()
    tm, tn = _pick_tiles(M, K, Np, x.dtype, out_dtype, budget)

    Mp = _round_up(M, tm)
    if Mp != M:
        x = jnp.pad(x, ((0, 0), (0, Mp - M), (0, 0)))

    # M innermost (fastest varying) -> the weight tile's block index is
    # unchanged across consecutive steps and its DMA is skipped.
    grid = (P, Np // tn, Mp // tm)

    out = pl.pallas_call(
        _dense_gelu_kernel,
        out_shape=jax.ShapeDtypeStruct((P, Mp, Np), out_dtype),
        grid_spec=pltpu.PrefetchScalarGridSpec(
            num_scalar_prefetch=0,
            grid=grid,
            in_specs=[
                # activation tile: depends on (pair, m)
                pl.BlockSpec((None, tm, K), lambda p, j, i: (p, i, 0)),
                # weight slab: depends only on (pair, n) -> reused across M
                pl.BlockSpec((None, K, tn), lambda p, j, i: (p, 0, j)),
                # bias tile (f32): depends only on (pair, n)
                pl.BlockSpec((None, 1, tn), lambda p, j, i: (p, 0, j)),
            ],
            out_specs=pl.BlockSpec((None, tm, tn), lambda p, j, i: (p, i, j)),
        ),
        compiler_params=pltpu.CompilerParams(
            # pair + N axes are independent -> megacore split on v7x (the pair
            # axis alone keeps both TensorCores busy when Np//tn == 1);
            # innermost M axis sequential ("arbitrary") for weight reuse.
            dimension_semantics=("parallel", "parallel", "arbitrary"),
            vmem_limit_bytes=int(budget),
        ),
    )(x, w, b)

    if Mp != M or Np != n_valid:
        out = out[:, :M, :n_valid]
    return out


class BertIntermediatePallas:
    """Two dense+gelu layers applied to the two input streams in ONE fused kernel."""

    def __init__(self, hidden_size, intermediate_size, key,
                 compute_dtype=jnp.bfloat16):
        k1, k2, k3, k4 = jax.random.split(key, 4)
        scale = 1.0 / math.sqrt(hidden_size)
        self.hidden_size = hidden_size
        self.intermediate_size = intermediate_size
        self.compute_dtype = compute_dtype

        # f32 master parameters, stored (K, N) = (hidden, intermediate)
        # layout (transposed vs torch's (N, K)).
        self.w1 = jax.random.normal(k1, (hidden_size, intermediate_size),
                                    jnp.float32) * scale
        self.b1 = jax.random.normal(k2, (intermediate_size,), jnp.float32) * 0.01
        self.w2 = jax.random.normal(k3, (hidden_size, intermediate_size),
                                    jnp.float32) * scale
        self.b2 = jax.random.normal(k4, (intermediate_size,), jnp.float32) * 0.01

        # --- Pre-stage ONCE: stack, pad N to a lane multiple, cast. ---
        Np = _round_up(intermediate_size, 128)
        w = jnp.stack([self.w1, self.w2])                        # (2, K, N)
        b = jnp.stack([self.b1, self.b2]).reshape(2, 1, intermediate_size)
        if Np != intermediate_size:
            pad = Np - intermediate_size
            w = jnp.pad(w, ((0, 0), (0, 0), (0, pad)))
            b = jnp.pad(b, ((0, 0), (0, 0), (0, pad)))
        self._w = w.astype(compute_dtype)     # MXU dtype (bf16 fast path)
        self._b = b.astype(jnp.float32)       # bias stays f32 (f32 epilogue)
        self._Np = Np

    def __call__(self, hidden_states):
        hs1, hs2 = hidden_states  # each (batch, seq, hidden)
        B, S, H = hs1.shape
        N = self.intermediate_size

        x = jnp.stack([hs1.reshape(B * S, H), hs2.reshape(B * S, H)])
        x = x.astype(self.compute_dtype)

        out = dense_gelu_pair(x, self._w, self._b, n_valid=N)   # (2, B*S, N)
        return [out[0].reshape(B, S, N), out[1].reshape(B, S, N)]


def _reference(hidden_states, module):
    """Pure-JAX f32 reference for correctness checking."""
    hs1, hs2 = hidden_states
    y1 = jnp.einsum("bsh,hn->bsn", hs1, module.w1) + module.b1
    y2 = jnp.einsum("bsh,hn->bsn", hs2, module.w2) + module.b2
    return [_gelu_exact(y1), _gelu_exact(y2)]


if __name__ == "__main__":
    batch, seq, hidden, intermediate = 2, 8, 32, 128

    key = jax.random.PRNGKey(0)
    k_in1, k_in2, k_params, k_p2, k_in3 = jax.random.split(key, 5)

    hs1 = jax.random.normal(k_in1, (batch, seq, hidden), jnp.float32)
    hs2 = jax.random.normal(k_in2, (batch, seq, hidden), jnp.float32)

    # --- f32 compute path: must match the erf-gelu reference tightly. ---
    module_f32 = BertIntermediatePallas(hidden, intermediate, k_params,
                                        compute_dtype=jnp.float32)
    ref = _reference([hs1, hs2], module_f32)

    out = module_f32([hs1, hs2])
    out = [jax.block_until_ready(o) for o in out]
    for o, r in zip(out, ref):
        assert o.shape == (batch, seq, intermediate)
        assert jnp.allclose(o, r, atol=1e-5, rtol=1e-5)

    # --- bf16 default fast path: f32 accumulation, looser tolerance. ---
    module_bf16 = BertIntermediatePallas(hidden, intermediate, k_params)
    out_bf16 = module_bf16([hs1, hs2])
    out_bf16 = [jax.block_until_ready(o) for o in out_bf16]
    for o, r in zip(out_bf16, ref):
        assert o.shape == (batch, seq, intermediate)
        assert jnp.allclose(o.astype(jnp.float32), r, atol=6e-2, rtol=6e-2)

    # --- ragged shapes exercise the padding path (M=5 -> 8, N=200 -> 256). ---
    module2 = BertIntermediatePallas(hidden, 200, k_p2,
                                     compute_dtype=jnp.float32)
    hs3 = jax.random.normal(k_in3, (1, 5, hidden), jnp.float32)
    out2 = module2([hs3, hs3])
    out2 = [jax.block_until_ready(o) for o in out2]
    ref2 = _reference([hs3, hs3], module2)
    for o, r in zip(out2, ref2):
        assert o.shape == (1, 5, 200)
        assert jnp.allclose(o, r, atol=1e-5, rtol=1e-5)

    print("KERNEL_OK")
</pallas_src>

<mosaic_0001>
module attributes {stable_mosaic.version = 11 : i64} {
  func.func @_dense_gelu_kernel(%arg0: i32, %arg1: i32, %arg2: i32, %arg3: memref<1x16x32xf32, #tpu.memory_space<vmem>>, %arg4: memref<1x32x128xf32, #tpu.memory_space<vmem>>, %arg5: memref<1x1x128xf32, #tpu.memory_space<vmem>>, %arg6: memref<1x16x128xf32, #tpu.memory_space<vmem>>) attributes {dimension_semantics = [#tpu.dimension_semantics<parallel>, #tpu.dimension_semantics<parallel>, #tpu.dimension_semantics<arbitrary>], iteration_bounds = array<i64: 2, 1, 1>, scalar_prefetch = 0 : i64, scratch_operands = 0 : i64, tpu.core_type = #tpu.core_type<tc>, window_params = [{transform_indices = @transform_0, window_bounds = array<i64: 1, 16, 32>}, {transform_indices = @transform_1, window_bounds = array<i64: 1, 32, 128>}, {transform_indices = @transform_2, window_bounds = array<i64: 1, 1, 128>}, {transform_indices = @transform_3, window_bounds = array<i64: 1, 16, 128>}]} {
    %c0 = arith.constant 0 : index
    %c0_0 = arith.constant 0 : index
    %c0_1 = arith.constant 0 : index
    %0 = vector.load %arg3[%c0, %c0_0, %c0_1] : memref<1x16x32xf32, #tpu.memory_space<vmem>>, vector<1x16x32xf32>
    %1 = vector.shape_cast %0 : vector<1x16x32xf32> to vector<16x32xf32>
    %c0_2 = arith.constant 0 : index
    %c0_3 = arith.constant 0 : index
    %c0_4 = arith.constant 0 : index
    %2 = vector.load %arg4[%c0_2, %c0_3, %c0_4] : memref<1x32x128xf32, #tpu.memory_space<vmem>>, vector<1x32x128xf32>
    %3 = vector.shape_cast %2 : vector<1x32x128xf32> to vector<32x128xf32>
    %cst = arith.constant dense<0.000000e+00> : vector<16x128xf32>
    %4 = tpu.matmul %1, %3, %cst {dimension_numbers = #tpu.dot_dimension_numbers<[1], [0], [0], [1], [0, 0, 1, 1], [], []>} : vector<16x32xf32>, vector<32x128xf32>, vector<16x128xf32> -> vector<16x128xf32>
    %c0_5 = arith.constant 0 : index
    %c0_6 = arith.constant 0 : index
    %c0_7 = arith.constant 0 : index
    %5 = vector.load %arg5[%c0_5, %c0_6, %c0_7] : memref<1x1x128xf32, #tpu.memory_space<vmem>>, vector<1x1x128xf32>
    %6 = vector.shape_cast %5 : vector<1x1x128xf32> to vector<1x128xf32>
    %7 = vector.broadcast %6 : vector<1x128xf32> to vector<16x128xf32>
    %8 = arith.addf %4, %7 : vector<16x128xf32>
    %cst_8 = arith.constant 5.000000e-01 : f32
    %9 = vector.broadcast %cst_8 : f32 to vector<16x128xf32>
    %10 = arith.mulf %8, %9 : vector<16x128xf32>
    %cst_9 = arith.constant 0.707106769 : f32
    %11 = vector.broadcast %cst_9 : f32 to vector<16x128xf32>
    %12 = arith.mulf %8, %11 : vector<16x128xf32>
    %13 = math.erf %12 : vector<16x128xf32>
    %cst_10 = arith.constant 1.000000e+00 : f32
    %14 = vector.broadcast %cst_10 : f32 to vector<16x128xf32>
    %15 = arith.addf %14, %13 : vector<16x128xf32>
    %16 = arith.mulf %10, %15 : vector<16x128xf32>
    %c0_11 = arith.constant 0 : index
    %c0_12 = arith.constant 0 : index
    %c0_13 = arith.constant 0 : index
    %17 = vector.load %arg6[%c0_11, %c0_12, %c0_13] : memref<1x16x128xf32, #tpu.memory_space<vmem>>, vector<1x16x128xf32>
    %18 = vector.shape_cast %17 : vector<1x16x128xf32> to vector<16x128xf32>
    %19 = vector.shape_cast %16 : vector<16x128xf32> to vector<1x16x128xf32>
    tpu.vector_store %arg6[%c0_11, %c0_12, %c0_13], %19 {strides = array<i32>} : memref<1x16x128xf32, #tpu.memory_space<vmem>>, vector<1x16x128xf32>,
    return
  }
  func.func @transform_0(%arg0: i32, %arg1: i32, %arg2: i32) -> (i32, i32, i32) {
    %c0_i32 = arith.constant 0 : i32
    %c0_i32_0 = arith.constant 0 : i32
    return %arg0, %arg2, %c0_i32 : i32, i32, i32
  }
  func.func @transform_1(%arg0: i32, %arg1: i32, %arg2: i32) -> (i32, i32, i32) {
    %c0_i32 = arith.constant 0 : i32
    %c0_i32_0 = arith.constant 0 : i32
    return %arg0, %c0_i32, %arg1 : i32, i32, i32
  }
  func.func @transform_2(%arg0: i32, %arg1: i32, %arg2: i32) -> (i32, i32, i32) {
    %c0_i32 = arith.constant 0 : i32
    %c0_i32_0 = arith.constant 0 : i32
    return %arg0, %c0_i32, %arg1 : i32, i32, i32
  }
  func.func @transform_3(%arg0: i32, %arg1: i32, %arg2: i32) -> (i32, i32, i32) {
    %c0_i32 = arith.constant 0 : i32
    return %arg0, %arg2, %arg1 : i32, i32, i32
  }
}

</mosaic_0001>

<llo_original>
// kernel: tpu_custom_call.1
$region0: #{tpu_custom_call.1}
  #allocation0 [shape = 'u32[]', space=smem, size = 0x4, offset = 0x4, fixed_abs, tag = 'smem constant byte address 0x4 - core index']
  #allocation1 [shape = 'u32[72,128]{1,0:T(1,128)}', space=vmem, size = 0x9000, scoped, tag = 'internal scratch']
  %s0 = inlined_call_operand.hbm [shape: f32[2,16,32], index: 0, kind: input, shape index: {}]
  %s1 = inlined_call_operand.hbm [shape: f32[2,32,128], index: 1, kind: input, shape index: {}]
  %s2 = inlined_call_operand.hbm [shape: f32[2,1,128], index: 2, kind: input, shape index: {}]
  %s3 = inlined_call_operand.hbm [shape: f32[2,16,128], index: 3, kind: output, shape index: {}]
  %s4 = sld [smem:[#allocation0]]
  $region57: #{tpu_custom_call.1} parent=0
    _
  %s6 = ssub.s32 1, %s4
  %s7 = scalar_select 0, %s6, %s4
  $region1: #{tpu_custom_call.1} parent=0
    #allocation2 [shape = 'u8[16384]{0}', space=vmem, size = 0x4000, scoped, tag = 'input window, operand 0']
    #allocation3 [shape = 's32[2]{0}', space=sflag, size = 0x8, scoped, tag = 'scoped memory for tpu_custom_call.1']
    #allocation4 [shape = 's32[2]{0}', space=sflag, size = 0x8, scoped, tag = 'scoped memory for tpu_custom_call.1']
    #allocation5 [shape = 'u8[32768]{0}', space=vmem, size = 0x8000, scoped, tag = 'input window, operand 1']
    #allocation6 [shape = 's32[2]{0}', space=sflag, size = 0x8, scoped, tag = 'scoped memory for tpu_custom_call.1']
    #allocation7 [shape = 'u8[1024]{0}', space=vmem, size = 0x400, scoped, tag = 'input window, operand 2']
    #allocation8 [shape = 'u8[16384]{0}', space=vmem, size = 0x4000, scoped, tag = 'output window, operand 0']
    %8 = vsyncpa [#allocation3], 0
    %s9 = scalar_lea.sflag [#allocation3], 1
    %10 = vsyncpa %s9, 0
    %11 = vsyncpa [#allocation6], 0
    %s12 = scalar_lea.sflag [#allocation6], 1
    %13 = vsyncpa %s12, 0
    %14 = vsyncpa [#allocation4], 0
    %s15 = scalar_lea.sflag [#allocation4], 1
    %16 = vsyncpa %s15, 0
    loop: start=0, step=1, limit=4
    $region2: #{tpu_custom_call.1} parent=1 // loop_pre_header
      _
    $region3: #{tpu_custom_call.1} parent=1 // loop_header
      %s18 = sphi 0, %s22
      %p19 = scmp.ge.s32.totalorder %s18, 4
      %s25 = sphi 0, %s44
      %s26 = sphi 0, %s40
      %s27 = sphi 0, %s36
      %s28 = sphi 0, %s25
      %s29 = sphi 0, %s26
      %s30 = sphi 0, %s27
      %s31 = sphi 0, %s28
      %s32 = sphi 0, %s29
      %s33 = sphi 0, %s30
      %s49 = sphi 0, %s51
      %s52 = sphi 0, %s49
      %s53 = sphi 0, %s52
      %s69 = sphi 0, %s53
      %s77 = sphi 0, %s79
      %s80 = sphi 0, %s77
      %s81 = sphi 0, %s80
      %s97 = sphi 0, %s81
      %s105 = sphi 0, %s107
      %s108 = sphi 0, %s105
      %s109 = sphi 0, %s108
      %s125 = sphi 0, %s109
      %s135 = sphi 0, %s137
      %s138 = sphi 0, %s135
      %s139 = sphi 0, %s138
      %s155 = sphi 0, %s139
    $region4: #{tpu_custom_call.1} parent=1 // loop_header_branch
      %21 = sbr.rel (%p19) target = $region8
    $region5: #{tpu_custom_call.1} parent=1 // loop_body
      %s23 = ssub.s32 %s18, 1
      %s24 = ssub.s32 %s18, 2
      %s34 = sadd.s32 1, %s27
      %p35 = scmp.ge.s32.totalorder %s34, 1
      %s36 = scalar_select %p35, 0, %s34
      %s37 = sadd.s32 1, %s26
      %s38 = scalar_select %p35, %s37, %s26
      %p39 = scmp.ge.s32.totalorder %s38, 1
      %s40 = scalar_select %p39, 0, %s38
      %s41 = sadd.s32 1, %s25
      %s42 = scalar_select %p39, %s41, %s25
      %p43 = scmp.ge.s32.totalorder %s42, 2
      %s44 = scalar_select %p43, 0, %s42
      %s45 = ssub.s32 %s25, %s44
      %s46 = ssub.s32 %s27, %s36
      %s47 = sor.u32 %s45, %s46
      %p48 = scmp.eq.s32.totalorder %s47, 0
      %s50 = sadd.s32 %s49, 1
      %s51 = scalar_select %p48, %s49, %s50
      %p54 = pneg %p48
      %p55 = scmp.eq.s32.totalorder %s18, 1
      %p56 = por %p54, %p55
      %p57 = scmp.ne.s32.totalorder %s49, %s52
      %p58 = scmp.eq.s32.totalorder %s18, 0
      %p59 = por %p57, %p58
      %p60 = scmp.ne.s32.totalorder %s49, %s52
      %p61 = scmp.eq.s32.totalorder %s23, 1
      %p62 = por %p60, %p61
      %p63 = scmp.ne.s32.totalorder %s52, %s53
      %p64 = scmp.eq.s32.totalorder %s23, 0
      %p65 = por %p63, %p64
      %p66 = scmp.ne.s32.totalorder %s52, %s53
      %p67 = scmp.eq.s32.totalorder %s24, 1
      %p68 = por %p66, %p67
      %p70 = scmp.ne.s32.totalorder %s53, %s69
      %p71 = scmp.eq.s32.totalorder %s24, 0
      %p72 = por %p70, %p71
      %s73 = ssub.s32 %s25, %s44
      %s74 = ssub.s32 %s26, %s40
      %s75 = sor.u32 %s73, %s74
      %p76 = scmp.eq.s32.totalorder %s75, 0
      %s78 = sadd.s32 %s77, 1
      %s79 = scalar_select %p76, %s77, %s78
      %p82 = pneg %p76
      %p83 = scmp.eq.s32.totalorder %s18, 1
      %p84 = por %p82, %p83
      %p85 = scmp.ne.s32.totalorder %s77, %s80
      %p86 = scmp.eq.s32.totalorder %s18, 0
      %p87 = por %p85, %p86
      %p88 = scmp.ne.s32.totalorder %s77, %s80
      %p89 = scmp.eq.s32.totalorder %s23, 1
      %p90 = por %p88, %p89
      %p91 = scmp.ne.s32.totalorder %s80, %s81
      %p92 = scmp.eq.s32.totalorder %s23, 0
      %p93 = por %p91, %p92
      %p94 = scmp.ne.s32.totalorder %s80, %s81
      %p95 = scmp.eq.s32.totalorder %s24, 1
      %p96 = por %p94, %p95
      %p98 = scmp.ne.s32.totalorder %s81, %s97
      %p99 = scmp.eq.s32.totalorder %s24, 0
      %p100 = por %p98, %p99
      %s101 = ssub.s32 %s25, %s44
      %s102 = ssub.s32 %s26, %s40
      %s103 = sor.u32 %s101, %s102
      %p104 = scmp.eq.s32.totalorder %s103, 0
      %s106 = sadd.s32 %s105, 1
      %s107 = scalar_select %p104, %s105, %s106
      %p110 = pneg %p104
      %p111 = scmp.eq.s32.totalorder %s18, 1
      %p112 = por %p110, %p111
      %p113 = scmp.ne.s32.totalorder %s105, %s108
      %p114 = scmp.eq.s32.totalorder %s18, 0
      %p115 = por %p113, %p114
      %p116 = scmp.ne.s32.totalorder %s105, %s108
      %p117 = scmp.eq.s32.totalorder %s23, 1
      %p118 = por %p116, %p117
      %p119 = scmp.ne.s32.totalorder %s108, %s109
      %p120 = scmp.eq.s32.totalorder %s23, 0
      %p121 = por %p119, %p120
      %p122 = scmp.ne.s32.totalorder %s108, %s109
      %p123 = scmp.eq.s32.totalorder %s24, 1
      %p124 = por %p122, %p123
      %p126 = scmp.ne.s32.totalorder %s109, %s125
      %p127 = scmp.eq.s32.totalorder %s24, 0
      %p128 = por %p126, %p127
      %s129 = ssub.s32 %s25, %s44
      %s130 = ssub.s32 %s27, %s36
      %s131 = sor.u32 %s129, %s130
      %s132 = ssub.s32 %s26, %s40
      %s133 = sor.u32 %s131, %s132
      %p134 = scmp.eq.s32.totalorder %s133, 0
      %s136 = sadd.s32 %s135, 1
      %s137 = scalar_select %p134, %s135, %s136
      %p140 = pneg %p134
      %p141 = scmp.eq.s32.totalorder %s18, 1
      %p142 = por %p140, %p141
      %p143 = scmp.ne.s32.totalorder %s135, %s138
      %p144 = scmp.eq.s32.totalorder %s18, 0
      %p145 = por %p143, %p144
      %p146 = scmp.ne.s32.totalorder %s135, %s138
      %p147 = scmp.eq.s32.totalorder %s23, 1
      %p148 = por %p146, %p147
      %p149 = scmp.ne.s32.totalorder %s138, %s139
      %p150 = scmp.eq.s32.totalorder %s23, 0
      %p151 = por %p149, %p150
      %p152 = scmp.ne.s32.totalorder %s138, %s139
      %p153 = scmp.eq.s32.totalorder %s24, 1
      %p154 = por %p152, %p153
      %p156 = scmp.ne.s32.totalorder %s139, %s155
      %p157 = scmp.eq.s32.totalorder %s24, 0
      %p158 = por %p156, %p157
      %p159 = scmp.le.s32.totalorder 1, %s18
      %p160 = scmp.lt.s32.totalorder %s18, 3
      %p161 = pnand %p159, %p160
      %p162 = pneg %p161
      // Predicated region
      $region9: #{tpu_custom_call.1} parent=5 // pred_check
        _
      $region10: #{tpu_custom_call.1} parent=5 // pred_check_branch
        %164 = sbr.rel (%p161) target = $region12
      $region11: #{tpu_custom_call.1} parent=5 // pred_region
        %s165 = ssub.s32 %s18, 1
      $region12: #{tpu_custom_call.1} parent=5 // pred_fallthru
        _
      %p166 = scmp.lt.s32.totalorder %s18, 2
      // Predicated region
      $region13: #{tpu_custom_call.1} parent=5 // pred_check
        %p167 = pneg %p166
      $region14: #{tpu_custom_call.1} parent=5 // pred_check_branch
        %169 = sbr.rel (%p167) target = $region16
      $region15: #{tpu_custom_call.1} parent=5 // pred_region
        // Predicated region
        $region17: #{tpu_custom_call.1} parent=15 // pred_check
          %p170 = pneg %p59
        $region18: #{tpu_custom_call.1} parent=15 // pred_check_branch
          %172 = sbr.rel (%p170) target = $region20
        $region19: #{tpu_custom_call.1} parent=15 // pred_region
          %s173 = sand.u32 %s49, 1
          %s174 = scalar_lea.sflag [#allocation3], %s173
          %s175 = sand.u32 %s49, 1
          %s176 = smul.addr %s175, 16
          %s177 = scalar_lea.vmem [#allocation2], %s176
          %s178 = smul.u32 2, %s27
          %180 = vsyncadd %s174, 0
          %s181 = smul.addr %s25, 2
          %s182 = sadd.s32 %s178, %s181
          %s183 = smul.addr %s182, 8
          %s184 = scalar_lea.hbm %s0, %s183
          %s185 = sshll.u32 %s184, 4
          %s186 = int_to_ptr.hbm [resolvable:$true] %s185
          %s187 = sshll.u32 %s177, 4
          %s188 = int_to_ptr.vmem [resolvable:$true] %s187
          %193 = dma.hbm_to_vmem [thread:$0]  %s186, 256, %s188, %s174, 128, 128, 8
        $region20: #{tpu_custom_call.1} parent=15 // pred_fallthru
          _
        // Predicated region
        $region21: #{tpu_custom_call.1} parent=15 // pred_check
          %p194 = pneg %p87
        $region22: #{tpu_custom_call.1} parent=15 // pred_check_branch
          %196 = sbr.rel (%p194) target = $region24
        $region23: #{tpu_custom_call.1} parent=15 // pred_region
          %s197 = sand.u32 %s18, 1
          %s198 = scalar_lea.sflag [#allocation6], %s197
          %s199 = sand.u32 %s77, 1
          %s200 = smul.addr %s199, 32
          %s201 = scalar_lea.vmem [#allocation5], %s200
          %203 = vsyncadd %s198, 0
          %s204 = smul.addr %s25, 4
          %s205 = sadd.s32 %s26, %s204
          %s206 = smul.addr %s205, 8
          %s207 = scalar_lea.hbm %s1, %s206
          %s208 = sshll.u32 %s207, 4
          %s209 = int_to_ptr.hbm [resolvable:$true] %s208
          %s210 = sshll.u32 %s201, 4
          %s211 = int_to_ptr.vmem [resolvable:$true] %s210
          %216 = dma.hbm_to_vmem [thread:$0]  %s209, 512, %s211, %s198, 128, 128, 8
        $region24: #{tpu_custom_call.1} parent=15 // pred_fallthru
          _
        // Predicated region
        $region25: #{tpu_custom_call.1} parent=15 // pred_check
          %p217 = pneg %p115
        $region26: #{tpu_custom_call.1} parent=15 // pred_check_branch
          %219 = sbr.rel (%p217) target = $region28
        $region27: #{tpu_custom_call.1} parent=15 // pred_region
          %s220 = sand.u32 %s18, 1
          %s221 = scalar_lea.sflag [#allocation6], %s220
          %s222 = sand.u32 %s105, 1
          %s223 = scalar_lea.vmem [#allocation7], %s222
          %225 = vsyncadd %s221, 0
          %s226 = sadd.s32 %s26, %s25
          %s227 = scalar_lea.hbm %s2, %s226
          %s229 = sshll.u32 %s227, 4
          %s230 = int_to_ptr.hbm [resolvable:$true] %s229
          %s231 = sshll.u32 %s223, 4
          %s232 = int_to_ptr.vmem [resolvable:$true] %s231
          %234 = dma.hbm_to_vmem [thread:$0]  %s230, 16, %s232, %s221
        $region28: #{tpu_custom_call.1} parent=15 // pred_fallthru
          _
      $region16: #{tpu_custom_call.1} parent=5 // pred_fallthru
        _
      %p235 = scmp.le.s32.totalorder 1, %s18
      %p236 = scmp.lt.s32.totalorder %s18, 3
      %p237 = pnand %p235, %p236
      %p238 = pneg %p237
      // Predicated region
      $region29: #{tpu_custom_call.1} parent=5 // pred_check
        _
      $region30: #{tpu_custom_call.1} parent=5 // pred_check_branch
        %240 = sbr.rel (%p237) target = $region32
      $region31: #{tpu_custom_call.1} parent=5 // pred_region
        %s241 = ssub.s32 %s18, 1
        %s242 = sand.u32 %s52, 1
        %s243 = scalar_lea.sflag [#allocation3], %s242
        %s244 = sand.u32 %s52, 1
        %s245 = smul.addr %s244, 16
        %s246 = scalar_lea.vmem [#allocation2], %s245
        // Predicated region
        $region33: #{tpu_custom_call.1} parent=31 // pred_check
          %p247 = pneg %p65
        $region34: #{tpu_custom_call.1} parent=31 // pred_check_branch
          %249 = sbr.rel (%p247) target = $region36
        $region35: #{tpu_custom_call.1} parent=31 // pred_region
          %251 = dma.done %s243, 256
        $region36: #{tpu_custom_call.1} parent=31 // pred_fallthru
          _
        %s252 = sand.u32 %s23, 1
        %s253 = scalar_lea.sflag [#allocation6], %s252
        %s254 = sand.u32 %s80, 1
        %s255 = smul.addr %s254, 32
        %s256 = scalar_lea.vmem [#allocation5], %s255
        // Predicated region
        $region37: #{tpu_custom_call.1} parent=31 // pred_check
          %p257 = pneg %p93
        $region38: #{tpu_custom_call.1} parent=31 // pred_check_branch
          %259 = sbr.rel (%p257) target = $region40
        $region39: #{tpu_custom_call.1} parent=31 // pred_region
          %261 = dma.done %s253, 512
        $region40: #{tpu_custom_call.1} parent=31 // pred_fallthru
          _
        %s262 = sand.u32 %s23, 1
        %s263 = scalar_lea.sflag [#allocation6], %s262
        %s264 = sand.u32 %s108, 1
        %s265 = scalar_lea.vmem [#allocation7], %s264
        // Predicated region
        $region41: #{tpu_custom_call.1} parent=31 // pred_check
          %p266 = pneg %p121
        $region42: #{tpu_custom_call.1} parent=31 // pred_check_branch
          %268 = sbr.rel (%p266) target = $region44
        $region43: #{tpu_custom_call.1} parent=31 // pred_region
          %270 = dma.done %s263, 16
        $region44: #{tpu_custom_call.1} parent=31 // pred_fallthru
          _
        %s271 = sand.u32 %s52, 1
        %s272 = scalar_lea.sflag [#allocation3], %s271
        %s273 = sand.u32 %s52, 1
        %s274 = smul.addr %s273, 16
        %s275 = scalar_lea.vmem [#allocation2], %s274
        %p276 = pneg %p65
        %p277 = pneg %p62
        %s278 = sand.u32 %s23, 1
        %s279 = scalar_lea.sflag [#allocation6], %s278
        %s280 = sand.u32 %s80, 1
        %s281 = smul.addr %s280, 32
        %s282 = scalar_lea.vmem [#allocation5], %s281
        %p283 = pneg %p93
        %p284 = pneg %p90
        %s285 = sand.u32 %s23, 1
        %s286 = scalar_lea.sflag [#allocation6], %s285
        %s287 = sand.u32 %s108, 1
        %s288 = scalar_lea.vmem [#allocation7], %s287
        %p289 = pneg %p121
        %p290 = pneg %p118
        %p291 = pneg %p151
        %p292 = pneg %p148
        %s293 = sand.u32 %s138, 1
        %s294 = scalar_lea.sflag [#allocation4], %s293
        %s295 = sand.u32 %s138, 1
        %s296 = smul.addr %s295, 16
        %s297 = scalar_lea.vmem [#allocation8], %s296
        %s298 = smul.u32 2, %s30
        %s299 = smul.u32 2, %s30
        %v300 = vld [vmem:[%s246] sm:$0xff]
        %v301 = vld [vmem:[%s246 + $0x8] sm:$0xff]
        %v302 = vld [vmem:[%s256] sm:$0xff]
        %v303 = vld [vmem:[%s256 + $0x8] sm:$0xff]
        %v304 = vld [vmem:[%s256 + $0x10] sm:$0xff]
        %v305 = vld [vmem:[%s256 + $0x18] sm:$0xff]
        %v306 = vld [vmem:[%s265] sm:$0x1]
        %v308 = vperm.slane %v306, 0
        %vm310 = vcmask 261120
        %v312 = vsel %vm310, %v300, 0
        %v315 = vsel %vm310, %v301, 0
        %317 = vmatpush.msra.mxu0 0.0
        %318 = vmatpush.msra.mxu0 0.0
        %319 = vmatpush.msra.mxu0 0.0
        %320 = vmatpush.msra.mxu0 0.0
        %321 = vmatpush.msra.mxu0 0.0
        %322 = vmatpush.msra.mxu0 0.0
        %323 = vmatpush.msra.mxu0 0.0
        %324 = vmatpush.msra.mxu0 0.0
        %325 = vmatpush.msra.mxu0 0.0
        %326 = vmatpush.msra.mxu0 0.0
        %327 = vmatpush.msra.mxu0 0.0
        %328 = vmatpush.msra.mxu0 0.0
        %329 = vmatpush.msra.mxu0 %v305
        %330 = vmatpush.msra.mxu0 %v304
        %331 = vmatpush.msra.mxu0 %v303
        %332 = vmatpush.msra.mxu0 %v302
        %333 = vmatmul.f32.gmra.mxu0 %v312
        %v334 = vpop.f32.mrf.mxu0
        %v335 = vadd.f32 %v308, %v334
        %336 = vmatmul.f32.gmra.mxu0 %v315
        %v337 = vpop.f32.mrf.mxu0
        %v338 = vadd.f32 %v308, %v337
        %339 = vdwg.mxu0
        %v340 = vmul.f32 %v335, 0.5
        %v341 = vmul.f32 %v338, 0.5
        %v342 = vmul.f32 %v335, 0.70710677
        %v343 = vmul.f32 %v338, 0.70710677
        %v344 = vmul.f32 %v342, %v342
        %v345 = vmin.f32 16.0, %v344
        %v346 = vmul.f32 %v345, 2.1237322e-06
        %v347 = vadd.f32 %v346, 0.00028619796
        %v348 = vmul.f32 %v345, %v347
        %v349 = vadd.f32 %v348, 0.0036580483
        %v350 = vmul.f32 %v345, %v349
        %v351 = vadd.f32 %v350, 0.05243302
        %v352 = vmul.f32 %v345, %v351
        %v353 = vadd.f32 %v352, 0.18741608
        %v354 = vmul.f32 %v345, %v353
        %v355 = vadd.f32 %v354, 1.1283791
        %v356 = vmul.f32 %v342, %v355
        %v357 = vmul.f32 %v345, 3.8918573e-05
        %v358 = vadd.f32 %v357, 0.001143296
        %v359 = vmul.f32 %v345, %v358
        %v360 = vadd.f32 %v359, 0.014752088
        %v361 = vmul.f32 %v345, %v360
        %v362 = vadd.f32 %v361, 0.112945676
        %v363 = vmul.f32 %v345, %v362
        %v364 = vadd.f32 %v363, 0.4994258
        %v365 = vmul.f32 %v345, %v364
        %v366 = vadd.f32 %v365, 1.0
        %v367 = vrcp.pop %v366
        %v368 = vmul.f32 %v366, %v367
        %v369 = vsub.f32 1.0, %v368
        %v370 = vmul.f32 %v367, %v369
        %v371 = vadd.f32 %v367, %v370
        %vm372 = vweird.f32 %v366
        %vm373 = vweird.f32 %v367
        %vm374 = vmor %vm372, %vm373
        %v375 = vsel %vm374, %v367, %v371
        %v376 = vand.u32 2147483647, %v366
        %vm377 = vcmp.eq.f32.partialorder %v376, 8.507059e+37
        %v378 = vand.u32 %v366, 2147483648
        %v379 = vor.u32 1.1754944e-38, %v378
        %v380 = vsel %vm377, %v379, %v375
        %v381 = vmul.f32 %v356, %v380
        %v382 = vmin.f32 %v381, 1.0
        %v383 = vmax.f32 %v382, -1.0
        %v384 = vmul.f32 %v343, %v343
        %v385 = vmin.f32 16.0, %v384
        %v386 = vmul.f32 %v385, 2.1237322e-06
        %v387 = vadd.f32 %v386, 0.00028619796
        %v388 = vmul.f32 %v385, %v387
        %v389 = vadd.f32 %v388, 0.0036580483
        %v390 = vmul.f32 %v385, %v389
        %v391 = vadd.f32 %v390, 0.05243302
        %v392 = vmul.f32 %v385, %v391
        %v393 = vadd.f32 %v392, 0.18741608
        %v394 = vmul.f32 %v385, %v393
        %v395 = vadd.f32 %v394, 1.1283791
        %v396 = vmul.f32 %v343, %v395
        %v397 = vmul.f32 %v385, 3.8918573e-05
        %v398 = vadd.f32 %v397, 0.001143296
        %v399 = vmul.f32 %v385, %v398
        %v400 = vadd.f32 %v399, 0.014752088
        %v401 = vmul.f32 %v385, %v400
        %v402 = vadd.f32 %v401, 0.112945676
        %v403 = vmul.f32 %v385, %v402
        %v404 = vadd.f32 %v403, 0.4994258
        %v405 = vmul.f32 %v385, %v404
        %v406 = vadd.f32 %v405, 1.0
        %v407 = vrcp.pop %v406
        %v408 = vmul.f32 %v406, %v407
        %v409 = vsub.f32 1.0, %v408
        %v410 = vmul.f32 %v407, %v409
        %v411 = vadd.f32 %v407, %v410
        %vm412 = vweird.f32 %v406
        %vm413 = vweird.f32 %v407
        %vm414 = vmor %vm412, %vm413
        %v415 = vsel %vm414, %v407, %v411
        %v416 = vand.u32 2147483647, %v406
        %vm417 = vcmp.eq.f32.partialorder %v416, 8.507059e+37
        %v418 = vand.u32 %v406, 2147483648
        %v419 = vor.u32 1.1754944e-38, %v418
        %v420 = vsel %vm417, %v419, %v415
        %v421 = vmul.f32 %v396, %v420
        %v422 = vmin.f32 %v421, 1.0
        %v423 = vmax.f32 %v422, -1.0
        %v424 = vadd.f32 %v383, 1.0
        %v425 = vadd.f32 %v423, 1.0
        %v426 = vmul.f32 %v340, %v424
        %v427 = vmul.f32 %v341, %v425
        %428 = vst [vmem:[%s297] sm:$0xff] %v426
        %429 = vst [vmem:[%s297 + $0x8] sm:$0xff] %v427
        %s430 = sand.u32 %s138, 1
        %s431 = scalar_lea.sflag [#allocation4], %s430
        %s432 = sand.u32 %s138, 1
        %s433 = smul.addr %s432, 16
        %s434 = scalar_lea.vmem [#allocation8], %s433
        // Predicated region
        $region45: #{tpu_custom_call.1} parent=31 // pred_check
          %p435 = pneg %p148
        $region46: #{tpu_custom_call.1} parent=31 // pred_check_branch
          %437 = sbr.rel (%p435) target = $region48
        $region47: #{tpu_custom_call.1} parent=31 // pred_region
          %s438 = smul.u32 2, %s30
          %440 = vsyncadd %s431, 0
          %s441 = sadd.s32 %s29, %s438
          %s442 = smul.addr %s28, 2
          %s443 = sadd.s32 %s441, %s442
          %s444 = smul.addr %s443, 8
          %s445 = scalar_lea.hbm %s3, %s444
          %s446 = sshll.u32 %s434, 4
          %s447 = int_to_ptr.vmem [resolvable:$true] %s446
          %s448 = sshll.u32 %s445, 4
          %s449 = int_to_ptr.hbm [resolvable:$true] %s448
          %454 = dma.vmem_to_hbm [thread:$0]  %s447, 256, %s449, %s431, 128, 128, 8
        $region48: #{tpu_custom_call.1} parent=31 // pred_fallthru
          _
      $region32: #{tpu_custom_call.1} parent=5 // pred_fallthru
        _
      %p455 = scmp.le.s32.totalorder 2, %s18
      // Predicated region
      $region49: #{tpu_custom_call.1} parent=5 // pred_check
        %p456 = pneg %p455
      $region50: #{tpu_custom_call.1} parent=5 // pred_check_branch
        %458 = sbr.rel (%p456) target = $region52
      $region51: #{tpu_custom_call.1} parent=5 // pred_region
        %s459 = ssub.s32 %s18, 2
        // Predicated region
        $region53: #{tpu_custom_call.1} parent=51 // pred_check
          %p460 = pneg %p154
        $region54: #{tpu_custom_call.1} parent=51 // pred_check_branch
          %462 = sbr.rel (%p460) target = $region56
        $region55: #{tpu_custom_call.1} parent=51 // pred_region
          %s463 = sand.u32 %s139, 1
          %s464 = scalar_lea.sflag [#allocation4], %s463
          %s465 = sand.u32 %s139, 1
          %s466 = smul.addr %s465, 16
          %s467 = scalar_lea.vmem [#allocation8], %s466
          %469 = dma.done %s464, 256
        $region56: #{tpu_custom_call.1} parent=51 // pred_fallthru
          _
      $region52: #{tpu_custom_call.1} parent=5 // pred_fallthru
        _
    $region6: #{tpu_custom_call.1} parent=1 // loop_footer
      %s22 = sadd.s32 1, %s18
    $region7: #{tpu_custom_call.1} parent=1 // loop_footer_branch
      %17 = sbr.rel target = $region3
    $region8: #{tpu_custom_call.1} parent=1 // loop_exit
      _
    %470 = vsyncpa [#allocation3], 1
    %s471 = scalar_lea.sflag [#allocation3], 1
    %472 = vsyncpa %s471, 1
    %473 = vsyncpa [#allocation6], 1
    %s474 = scalar_lea.sflag [#allocation6], 1
    %475 = vsyncpa %s474, 1
    %476 = vsyncpa [#allocation4], 1
    %s477 = scalar_lea.sflag [#allocation4], 1
    %478 = vsyncpa %s477, 1

</llo_original>
